<compile_context>
chip_gen: v5e
topology: v5e:2x2
jax: 0.10.0
libtpu: 0.0.40
codegen_flags: <defaults>
</compile_context>

<pallas_src>
import functools

import jax
import jax.numpy as jnp
from jax.experimental import pallas as pl
from jax.experimental.pallas import tpu as pltpu

SMOOTHING = 0.1
CONFIDENCE = 1.0 - SMOOTHING


def _ls_ce_kernel(x_ref, t_ref, loss_ref, *, num_classes):
    # x_ref: (TN, C) logits tile; t_ref: (TN, 1) int32 targets; loss_ref: (TN, 1) f32
    x = x_ref[...].astype(jnp.float32)                       # (TN, C)
    t = t_ref[...]                                           # (TN, 1)

    # numerically-stable logsumexp over the class axis
    m = jnp.max(x, axis=-1, keepdims=True)                   # (TN, 1)
    lse = jnp.log(jnp.sum(jnp.exp(x - m), axis=-1, keepdims=True)) + m

    # loss = lse - sum_c(w * x) with w = conf*onehot + smoothing/C  (sum(w)==1)
    base = jnp.float32(SMOOTHING / num_classes)
    col = jax.lax.broadcasted_iota(jnp.int32, x.shape, 1)
    w = jnp.where(col == t, jnp.float32(CONFIDENCE) + base, base)
    wx = jnp.sum(w * x, axis=-1, keepdims=True)              # (TN, 1)

    loss_ref[...] = lse - wx


def _round_up(v, m):
    return (v + m - 1) // m * m


def _pick_tile_rows(n, c, itemsize):
    # per-row VMEM: double-buffered input + ~3 full-width f32 temporaries
    per_row_bytes = 2 * c * itemsize + 3 * c * 4
    budget = 16 * 1024 * 1024                 # safe on v5e/v6e/v7x scoped VMEM
    rows = budget // max(1, per_row_bytes)
    rows = max(8, (rows // 8) * 8)
    rows = min(rows, 2048)
    n_ceil = _round_up(n, 8)
    rows = min(rows, n_ceil)
    # guarantee >= 2 grid tiles so the "parallel" batch axis shards across both
    # v7x TensorCores (no-op on single-TC v5e / v6e)
    if n_ceil > 8:
        rows = min(rows, max(8, (n_ceil // 2) // 8 * 8))
    return int(rows)


def _jax_reference_path(x, target):
    logp = jax.nn.log_softmax(x.astype(jnp.float32), axis=-1)
    nll = -jnp.take_along_axis(logp, target[:, None].astype(jnp.int32), axis=-1)[:, 0]
    smooth = -jnp.mean(logp, axis=-1)
    return jnp.mean(CONFIDENCE * nll + SMOOTHING * smooth)


def label_smoothing_cross_entropy(x, target, *, tile_rows=None, force_pallas=False):
    """x: (N, C) float logits, target: (N,) int -> scalar f32 loss (mean over N)."""
    n, c = x.shape

    # tiny problems: vregs mostly idle + grid overhead dominates -> plain JAX
    if not force_pallas and (c < 128 or n < 8):
        return _jax_reference_path(x, target)

    itemsize = jnp.dtype(x.dtype).itemsize
    tn = tile_rows if tile_rows is not None else _pick_tile_rows(n, c, itemsize)
    tn = max(8, (tn // 8) * 8)
    num_tiles = pl.cdiv(n, tn)

    t2d = target.astype(jnp.int32).reshape(n, 1)

    kernel = functools.partial(_ls_ce_kernel, num_classes=c)

    cost = pl.CostEstimate(
        flops=6 * n * c,
        transcendentals=n * c + n,                 # exp per element + log per row
        bytes_accessed=n * c * itemsize + 4 * n + 4 * n,
    )

    # explicit VMEM ceiling: generous (2x estimate) but capped for v7x's 64 MiB
    est = 2 * tn * c * itemsize + 3 * tn * c * 4 + 4 * tn * 16 + (1 << 20)
    vmem_limit = int(min(48 * 1024 * 1024, max(8 * 1024 * 1024, 2 * est)))

    per_row = pl.pallas_call(
        kernel,
        out_shape=jax.ShapeDtypeStruct((n, 1), jnp.float32),
        grid_spec=pltpu.PrefetchScalarGridSpec(
            num_scalar_prefetch=0,
            grid=(num_tiles,),
            in_specs=[
                pl.BlockSpec((tn, c), lambda i: (i, 0)),
                pl.BlockSpec((tn, 1), lambda i: (i, 0)),
            ],
            out_specs=pl.BlockSpec((tn, 1), lambda i: (i, 0)),
        ),
        compiler_params=pltpu.CompilerParams(
            dimension_semantics=("parallel",),
            vmem_limit_bytes=vmem_limit,
        ),
        cost_estimate=cost,
    )(x, t2d)

    # mean over the batch (partial boundary block never writes OOB rows)
    return jnp.sum(per_row[:, 0]) / jnp.float32(n)


if __name__ == "__main__":
    key = jax.random.PRNGKey(0)
    ks = jax.random.split(key, 6)

    def ref_loss(x, target):
        logp = jax.nn.log_softmax(x.astype(jnp.float32), axis=-1)
        nll = -jnp.take_along_axis(logp, target[:, None], axis=-1)[:, 0]
        smooth = -jnp.mean(logp, axis=-1)
        return jnp.mean(CONFIDENCE * nll + SMOOTHING * smooth)

    # case 1: tiny shapes matching the module's typical use (batch=8, classes=32)
    #         -> dispatched to the plain-JAX path.
    x1 = jax.random.normal(ks[0], (8, 32), dtype=jnp.float32)
    t1 = jax.random.randint(ks[1], (8,), 0, 32, dtype=jnp.int32)
    l1 = jax.block_until_ready(label_smoothing_cross_entropy(x1, t1))
    assert jnp.allclose(l1, ref_loss(x1, t1), atol=1e-5, rtol=1e-5), (l1, ref_loss(x1, t1))

    # case 2: Pallas path, N not a multiple of the tile -> partial boundary block
    #         (no jnp.pad copy), multi-tile parallel grid.
    x2 = jax.random.normal(ks[2], (20, 512), dtype=jnp.float32)
    t2 = jax.random.randint(ks[3], (20,), 0, 512, dtype=jnp.int32)
    l2 = jax.block_until_ready(label_smoothing_cross_entropy(x2, t2))
    assert jnp.allclose(l2, ref_loss(x2, t2), atol=1e-5, rtol=1e-5), (l2, ref_loss(x2, t2))

    # case 3: bf16 logits through the Pallas path with an explicit tile override.
    x3 = jax.random.normal(ks[4], (40, 256), dtype=jnp.float32).astype(jnp.bfloat16)
    t3 = jax.random.randint(ks[5], (40,), 0, 256, dtype=jnp.int32)
    l3 = jax.block_until_ready(
        label_smoothing_cross_entropy(x3, t3, tile_rows=16, force_pallas=True))
    assert jnp.allclose(l3, ref_loss(x3, t3), atol=1e-4, rtol=1e-4), (l3, ref_loss(x3, t3))

    print("KERNEL_OK")
</pallas_src>

<mosaic_0001>
module attributes {stable_mosaic.version = 11 : i64} {
  func.func @_ls_ce_kernel(%arg0: i32, %arg1: memref<8x512xf32, #tpu.memory_space<vmem>>, %arg2: memref<8x1xi32, #tpu.memory_space<vmem>>, %arg3: memref<8x1xf32, #tpu.memory_space<vmem>>) attributes {dimension_semantics = [#tpu.dimension_semantics<parallel>], iteration_bounds = array<i64: 3>, scalar_prefetch = 0 : i64, scratch_operands = 0 : i64, tpu.core_type = #tpu.core_type<tc>, window_params = [{transform_indices = @transform_0, window_bounds = array<i64: 8, 512>}, {transform_indices = @transform_1, window_bounds = array<i64: 8, 1>}, {transform_indices = @transform_2, window_bounds = array<i64: 8, 1>}]} {
    %c0 = arith.constant 0 : index
    %c0_0 = arith.constant 0 : index
    %0 = vector.load %arg1[%c0, %c0_0] : memref<8x512xf32, #tpu.memory_space<vmem>>, vector<8x512xf32>
    %c0_1 = arith.constant 0 : index
    %c0_2 = arith.constant 0 : index
    %1 = vector.load %arg2[%c0_1, %c0_2] : memref<8x1xi32, #tpu.memory_space<vmem>>, vector<8x1xi32>
    %cst = arith.constant dense<0xFF800000> : vector<8xf32>
    %2 = vector.multi_reduction <maximumf>, %0, %cst [1] : vector<8x512xf32> to vector<8xf32>
    %3 = vector.shape_cast %2 : vector<8xf32> to vector<8x1xf32>
    %4 = vector.broadcast %3 : vector<8x1xf32> to vector<8x512xf32>
    %5 = arith.subf %0, %4 : vector<8x512xf32>
    %6 = math.exp %5 : vector<8x512xf32>
    %cst_3 = arith.constant dense<0.000000e+00> : vector<8xf32>
    %7 = vector.multi_reduction <add>, %6, %cst_3 [1] : vector<8x512xf32> to vector<8xf32>
    %8 = vector.shape_cast %7 : vector<8xf32> to vector<8x1xf32>
    %9 = math.log %8 : vector<8x1xf32>
    %10 = arith.addf %9, %3 : vector<8x1xf32>
    %11 = tpu.iota {dimensions = array<i32: 1>} : vector<8x512xi32>
    %12 = vector.broadcast %1 : vector<8x1xi32> to vector<8x512xi32>
    %13 = arith.cmpi eq, %11, %12 : vector<8x512xi32>
    %cst_4 = arith.constant 0.899999976 : f32
    %cst_5 = arith.constant 1.95312503E-4 : f32
    %14 = arith.addf %cst_4, %cst_5 : f32
    %cst_6 = arith.constant 1.95312503E-4 : f32
    %15 = vector.broadcast %14 : f32 to vector<8x512xf32>
    %16 = vector.broadcast %cst_6 : f32 to vector<8x512xf32>
    %17 = arith.select %13, %15, %16 : vector<8x512xi1>, vector<8x512xf32>
    %18 = arith.mulf %17, %0 : vector<8x512xf32>
    %cst_7 = arith.constant dense<0.000000e+00> : vector<8xf32>
    %19 = vector.multi_reduction <add>, %18, %cst_7 [1] : vector<8x512xf32> to vector<8xf32>
    %20 = vector.shape_cast %19 : vector<8xf32> to vector<8x1xf32>
    %21 = arith.subf %10, %20 : vector<8x1xf32>
    %c0_8 = arith.constant 0 : index
    %c0_9 = arith.constant 0 : index
    %22 = vector.load %arg3[%c0_8, %c0_9] : memref<8x1xf32, #tpu.memory_space<vmem>>, vector<8x1xf32>
    tpu.vector_store %arg3[%c0_8, %c0_9], %21 {strides = array<i32>} : memref<8x1xf32, #tpu.memory_space<vmem>>, vector<8x1xf32>,
    return
  }
  func.func @transform_0(%arg0: i32) -> (i32, i32) {
    %c0_i32 = arith.constant 0 : i32
    %c0_i32_0 = arith.constant 0 : i32
    return %arg0, %c0_i32 : i32, i32
  }
  func.func @transform_1(%arg0: i32) -> (i32, i32) {
    %c0_i32 = arith.constant 0 : i32
    %c0_i32_0 = arith.constant 0 : i32
    return %arg0, %c0_i32 : i32, i32
  }
  func.func @transform_2(%arg0: i32) -> (i32, i32) {
    %c0_i32 = arith.constant 0 : i32
    %c0_i32_0 = arith.constant 0 : i32
    return %arg0, %c0_i32 : i32, i32
  }
}

</mosaic_0001>

<llo_original>
// kernel: tpu_custom_call.1
$region0: #{tpu_custom_call.1}
  #allocation0 [shape = 'u32[]', space=smem, size = 0x4, offset = 0x4, fixed_abs, tag = 'smem constant byte address 0x4 - core index']
  #allocation1 [shape = 'u32[72,128]{1,0:T(1,128)}', space=vmem, size = 0x9000, scoped, tag = 'internal scratch']
  %s0 = inlined_call_operand.hbm [shape: f32[20,512], index: 0, kind: input, shape index: {}]
  %s1 = inlined_call_operand.vmem [shape: s32[20,1], index: 1, kind: input, shape index: {}]
  %s2 = inlined_call_operand.vmem [shape: f32[20,1], index: 2, kind: output, shape index: {}]
  %s3 = sld [smem:[#allocation0]]
  $region45: #{tpu_custom_call.1} parent=0
    _
  %s5 = ssub.s32 1, %s3
  %s6 = scalar_select 0, %s5, %s3
  $region1: #{tpu_custom_call.1} parent=0
    #allocation2 [shape = 'u8[32768]{0}', space=vmem, size = 0x8000, scoped, tag = 'input window, operand 0']
    #allocation3 [shape = 's32[2]{0}', space=sflag, size = 0x8, scoped, tag = 'scoped memory for tpu_custom_call.1']
    %7 = vsyncpa [#allocation3], 0
    %s8 = scalar_lea.sflag [#allocation3], 1
    %9 = vsyncpa %s8, 0
    loop: start=0, step=1, limit=5
    $region2: #{tpu_custom_call.1} parent=1 // loop_pre_header
      _
    $region3: #{tpu_custom_call.1} parent=1 // loop_header
      %s11 = sphi 0, %s15
      %p12 = scmp.ge.s32.totalorder %s11, 5
      %s21 = sphi 0, %s23
      %s24 = sphi 0, %s21
      %s25 = sphi 0, %s24
      %s41 = sphi 0, %s25
      %s47 = sphi 0, %s49
      %s50 = sphi 0, %s47
      %s51 = sphi 0, %s50
      %s67 = sphi 0, %s51
      %s73 = sphi 0, %s75
      %s76 = sphi 0, %s73
      %s77 = sphi 0, %s76
      %s93 = sphi 0, %s77
    $region4: #{tpu_custom_call.1} parent=1 // loop_header_branch
      %14 = sbr.rel (%p12) target = $region8
    $region5: #{tpu_custom_call.1} parent=1 // loop_body
      %s16 = ssub.s32 %s11, 1
      %s17 = ssub.s32 %s11, 2
      %s18 = sadd.s32 %s11, 1
      %s19 = ssub.s32 %s11, %s18
      %p20 = scmp.eq.s32.totalorder %s19, 0
      %s22 = sadd.s32 %s21, 1
      %s23 = scalar_select %p20, %s21, %s22
      %p26 = pneg %p20
      %p27 = scmp.eq.s32.totalorder %s11, 2
      %p28 = por %p26, %p27
      %p29 = scmp.ne.s32.totalorder %s21, %s24
      %p30 = scmp.eq.s32.totalorder %s11, 0
      %p31 = por %p29, %p30
      %p32 = scmp.ne.s32.totalorder %s21, %s24
      %p33 = scmp.eq.s32.totalorder %s16, 2
      %p34 = por %p32, %p33
      %p35 = scmp.ne.s32.totalorder %s24, %s25
      %p36 = scmp.eq.s32.totalorder %s16, 0
      %p37 = por %p35, %p36
      %p38 = scmp.ne.s32.totalorder %s24, %s25
      %p39 = scmp.eq.s32.totalorder %s17, 2
      %p40 = por %p38, %p39
      %p42 = scmp.ne.s32.totalorder %s25, %s41
      %p43 = scmp.eq.s32.totalorder %s17, 0
      %p44 = por %p42, %p43
      %s45 = ssub.s32 %s11, %s18
      %p46 = scmp.eq.s32.totalorder %s45, 0
      %s48 = sadd.s32 %s47, 1
      %s49 = scalar_select %p46, %s47, %s48
      %p52 = pneg %p46
      %p53 = scmp.eq.s32.totalorder %s11, 2
      %p54 = por %p52, %p53
      %p55 = scmp.ne.s32.totalorder %s47, %s50
      %p56 = scmp.eq.s32.totalorder %s11, 0
      %p57 = por %p55, %p56
      %p58 = scmp.ne.s32.totalorder %s47, %s50
      %p59 = scmp.eq.s32.totalorder %s16, 2
      %p60 = por %p58, %p59
      %p61 = scmp.ne.s32.totalorder %s50, %s51
      %p62 = scmp.eq.s32.totalorder %s16, 0
      %p63 = por %p61, %p62
      %p64 = scmp.ne.s32.totalorder %s50, %s51
      %p65 = scmp.eq.s32.totalorder %s17, 2
      %p66 = por %p64, %p65
      %p68 = scmp.ne.s32.totalorder %s51, %s67
      %p69 = scmp.eq.s32.totalorder %s17, 0
      %p70 = por %p68, %p69
      %s71 = ssub.s32 %s11, %s18
      %p72 = scmp.eq.s32.totalorder %s71, 0
      %s74 = sadd.s32 %s73, 1
      %s75 = scalar_select %p72, %s73, %s74
      %p78 = pneg %p72
      %p79 = scmp.eq.s32.totalorder %s11, 2
      %p80 = por %p78, %p79
      %p81 = scmp.ne.s32.totalorder %s73, %s76
      %p82 = scmp.eq.s32.totalorder %s11, 0
      %p83 = por %p81, %p82
      %p84 = scmp.ne.s32.totalorder %s73, %s76
      %p85 = scmp.eq.s32.totalorder %s16, 2
      %p86 = por %p84, %p85
      %p87 = scmp.ne.s32.totalorder %s76, %s77
      %p88 = scmp.eq.s32.totalorder %s16, 0
      %p89 = por %p87, %p88
      %p90 = scmp.ne.s32.totalorder %s76, %s77
      %p91 = scmp.eq.s32.totalorder %s17, 2
      %p92 = por %p90, %p91
      %p94 = scmp.ne.s32.totalorder %s77, %s93
      %p95 = scmp.eq.s32.totalorder %s17, 0
      %p96 = por %p94, %p95
      %p97 = scmp.le.s32.totalorder 1, %s11
      %p98 = scmp.lt.s32.totalorder %s11, 4
      %p99 = pnand %p97, %p98
      %p100 = pneg %p99
      // Predicated region
      $region9: #{tpu_custom_call.1} parent=5 // pred_check
        _
      $region10: #{tpu_custom_call.1} parent=5 // pred_check_branch
        %102 = sbr.rel (%p99) target = $region12
      $region11: #{tpu_custom_call.1} parent=5 // pred_region
        %s103 = ssub.s32 %s11, 1
      $region12: #{tpu_custom_call.1} parent=5 // pred_fallthru
        _
      %p104 = scmp.lt.s32.totalorder %s11, 3
      // Predicated region
      $region13: #{tpu_custom_call.1} parent=5 // pred_check
        %p105 = pneg %p104
      $region14: #{tpu_custom_call.1} parent=5 // pred_check_branch
        %107 = sbr.rel (%p105) target = $region16
      $region15: #{tpu_custom_call.1} parent=5 // pred_region
        // Predicated region
        $region17: #{tpu_custom_call.1} parent=15 // pred_check
          %p108 = pneg %p31
        $region18: #{tpu_custom_call.1} parent=15 // pred_check_branch
          %110 = sbr.rel (%p108) target = $region20
        $region19: #{tpu_custom_call.1} parent=15 // pred_region
          %s111 = sand.u32 %s21, 1
          %s112 = scalar_lea.sflag [#allocation3], %s111
          %s113 = sand.u32 %s21, 1
          %s114 = smul.addr %s113, 32
          %s115 = scalar_lea.vmem [#allocation2], %s114
          %117 = vsyncadd %s112, 0
          %s118 = smul.addr %s11, 4
          %s119 = smul.addr %s118, 8
          %s120 = scalar_lea.hbm %s0, %s119
          %s122 = sshll.u32 %s120, 4
          %s123 = int_to_ptr.hbm [resolvable:$true] %s122
          %s124 = sshll.u32 %s115, 4
          %s125 = int_to_ptr.vmem [resolvable:$true] %s124
          %127 = dma.hbm_to_vmem [thread:$0]  %s123, 512, %s125, %s112
        $region20: #{tpu_custom_call.1} parent=15 // pred_fallthru
          _
        // Predicated region
        $region21: #{tpu_custom_call.1} parent=15 // pred_check
          %p128 = pneg %p57
        $region22: #{tpu_custom_call.1} parent=15 // pred_check_branch
          %130 = sbr.rel (%p128) target = $region24
        $region23: #{tpu_custom_call.1} parent=15 // pred_region
          %p131 = scmp.lt.s32.totalorder %s11, 2
          %s132 = scalar_select %p131, %s11, 2
          %s133 = smul.addr %s132, 8
          %s134 = scalar_lea.vmem %s1, %s133
        $region24: #{tpu_custom_call.1} parent=15 // pred_fallthru
          _
      $region16: #{tpu_custom_call.1} parent=5 // pred_fallthru
        _
      %p135 = scmp.le.s32.totalorder 1, %s11
      %p136 = scmp.lt.s32.totalorder %s11, 4
      %p137 = pnand %p135, %p136
      %p138 = pneg %p137
      // Predicated region
      $region25: #{tpu_custom_call.1} parent=5 // pred_check
        _
      $region26: #{tpu_custom_call.1} parent=5 // pred_check_branch
        %140 = sbr.rel (%p137) target = $region28
      $region27: #{tpu_custom_call.1} parent=5 // pred_region
        %s141 = ssub.s32 %s11, 1
        %s142 = sand.u32 %s24, 1
        %s143 = scalar_lea.sflag [#allocation3], %s142
        %s144 = sand.u32 %s24, 1
        %s145 = smul.addr %s144, 32
        %s146 = scalar_lea.vmem [#allocation2], %s145
        // Predicated region
        $region29: #{tpu_custom_call.1} parent=27 // pred_check
          %p147 = pneg %p37
        $region30: #{tpu_custom_call.1} parent=27 // pred_check_branch
          %149 = sbr.rel (%p147) target = $region32
        $region31: #{tpu_custom_call.1} parent=27 // pred_region
          %151 = dma.done %s143, 512
        $region32: #{tpu_custom_call.1} parent=27 // pred_fallthru
          _
        %s152 = sand.u32 %s24, 1
        %s153 = scalar_lea.sflag [#allocation3], %s152
        %s154 = sand.u32 %s24, 1
        %s155 = smul.addr %s154, 32
        %s156 = scalar_lea.vmem [#allocation2], %s155
        %p157 = pneg %p37
        %p158 = pneg %p34
        %p159 = scmp.lt.s32.totalorder %s16, 2
        %s160 = scalar_select %p159, %s16, 2
        %s161 = smul.addr %s160, 8
        %s162 = scalar_lea.vmem %s1, %s161
        %p163 = pneg %p63
        %p164 = pneg %p60
        %p165 = pneg %p89
        %p166 = pneg %p86
        %p167 = scmp.lt.s32.totalorder %s16, 2
        %s168 = scalar_select %p167, %s16, 2
        %s169 = smul.addr %s168, 8
        %s170 = scalar_lea.vmem %s2, %s169
        %p171 = scmp.lt.s32.totalorder %s16, 2
        %s172 = scalar_select %p171, %s16, 2
        %s173 = smul.addr %s172, 8
        %s174 = scalar_lea.vmem %s1, %s173
        %p175 = scmp.lt.s32.totalorder %s16, 2
        %s176 = scalar_select %p175, %s16, 2
        %s177 = smul.addr %s176, 8
        %s178 = scalar_lea.vmem %s2, %s177
        %v179 = vld [vmem:[%s146] sm:$0xff]
        %v180 = vld [vmem:[%s146 + $0x8] sm:$0xff]
        %v181 = vld [vmem:[%s146 + $0x10] sm:$0xff]
        %v182 = vld [vmem:[%s146 + $0x18] sm:$0xff]
        %v183 = vld [vmem:[%s174] sm:$0xff]
        %v184 = vmax.f32 %v179, %v180
        %v185 = vmax.f32 %v181, %v182
        %v186 = vmax.f32 %v184, %v185
        %187 = vmax.xlane.f32.xlu0 %v186
        %v188 = vpop.xlane.xlu0 %187
        %v189 = vsub.f32 %v179, %v188
        %v190 = vsub.f32 %v180, %v188
        %v191 = vsub.f32 %v181, %v188
        %v192 = vsub.f32 %v182, %v188
        %v193 = vmul.f32 %v189, 1.442695
        %v194 = vpow.pop %v193
        %v195 = vmul.f32 %v190, 1.442695
        %v196 = vpow.pop %v195
        %v197 = vmul.f32 %v191, 1.442695
        %v198 = vpow.pop %v197
        %v199 = vmul.f32 %v192, 1.442695
        %v200 = vpow.pop %v199
        %v201 = vadd.f32 %v194, %v196
        %v202 = vadd.f32 %v201, %v198
        %v203 = vadd.f32 %v202, %v200
        %204 = vadd.xlane.f32.xlu0 %v203
        %v205 = vpop.xlane.xlu0 %204
        %v206 = vlog2.pop %v205
        %v207 = vmul.f32 %v206, 0.6931472
        %v208 = vadd.f32 %v207, %v188
        %v209 = vlaneseq
        %v210 = vand.u32 %v209, 127
        %v211 = vadd.s32 %v210, 128
        %v212 = vadd.s32 %v210, 256
        %v213 = vadd.s32 %v210, 384
        %214 = vset.pattern.permute.xlu0 0
        %215 = vperm.xlu0 %214, %v183
        %v216 = vpop.permute.xlu0 %215
        %vm217 = vcmp.eq.s32.totalorder %v210, %v216
        %vm218 = vcmp.eq.s32.totalorder %v211, %v216
        %vm219 = vcmp.eq.s32.totalorder %v212, %v216
        %vm220 = vcmp.eq.s32.totalorder %v213, %v216
        %v221 = vsel %vm217, 0.9001953, 0.0001953125
        %v222 = vsel %vm218, 0.9001953, 0.0001953125
        %v223 = vsel %vm219, 0.9001953, 0.0001953125
        %v224 = vsel %vm220, 0.9001953, 0.0001953125
        %v225 = vmul.f32 %v221, %v179
        %v226 = vmul.f32 %v222, %v180
        %v227 = vmul.f32 %v223, %v181
        %v228 = vmul.f32 %v224, %v182
        %v229 = vadd.f32 %v225, %v226
        %v230 = vadd.f32 %v229, %v227
        %v231 = vadd.f32 %v230, %v228
        %232 = vadd.xlane.f32.xlu0 %v231
        %v233 = vpop.xlane.xlu0 %232
        %v234 = vsub.f32 %v208, %v233
        %vm235 = vcmask 7168
        %236 = vst.msk [vmem:[%s178] sm:$0xff] %vm235, %v234
        %p237 = scmp.lt.s32.totalorder %s16, 2
        %s238 = scalar_select %p237, %s16, 2
        %s239 = smul.addr %s238, 8
        %s240 = scalar_lea.vmem %s2, %s239
        // Predicated region
        $region33: #{tpu_custom_call.1} parent=27 // pred_check
          %p241 = pneg %p86
        $region34: #{tpu_custom_call.1} parent=27 // pred_check_branch
          %243 = sbr.rel (%p241) target = $region36
        $region35: #{tpu_custom_call.1} parent=27 // pred_region
          _
        $region36: #{tpu_custom_call.1} parent=27 // pred_fallthru
          _
      $region28: #{tpu_custom_call.1} parent=5 // pred_fallthru
        _
      %p244 = scmp.le.s32.totalorder 2, %s11
      // Predicated region
      $region37: #{tpu_custom_call.1} parent=5 // pred_check
        %p245 = pneg %p244
      $region38: #{tpu_custom_call.1} parent=5 // pred_check_branch
        %247 = sbr.rel (%p245) target = $region40
      $region39: #{tpu_custom_call.1} parent=5 // pred_region
        %s248 = ssub.s32 %s11, 2
        // Predicated region
        $region41: #{tpu_custom_call.1} parent=39 // pred_check
          %p249 = pneg %p92
        $region42: #{tpu_custom_call.1} parent=39 // pred_check_branch
          %251 = sbr.rel (%p249) target = $region44
        $region43: #{tpu_custom_call.1} parent=39 // pred_region
          %p252 = scmp.lt.s32.totalorder %s17, 2
          %s253 = scalar_select %p252, %s17, 2
          %s254 = smul.addr %s253, 8
          %s255 = scalar_lea.vmem %s2, %s254
        $region44: #{tpu_custom_call.1} parent=39 // pred_fallthru
          _
      $region40: #{tpu_custom_call.1} parent=5 // pred_fallthru
        _
    $region6: #{tpu_custom_call.1} parent=1 // loop_footer
      %s15 = sadd.s32 1, %s11
    $region7: #{tpu_custom_call.1} parent=1 // loop_footer_branch
      %10 = sbr.rel target = $region3
    $region8: #{tpu_custom_call.1} parent=1 // loop_exit
      _
    %256 = vsyncpa [#allocation3], 1
    %s257 = scalar_lea.sflag [#allocation3], 1
    %258 = vsyncpa %s257, 1

</llo_original>
